<compile_context>
chip_gen: v7x
topology: tpu7x:2x2x1
jax: 0.10.0
libtpu: 0.0.40
codegen_flags: <defaults>
</compile_context>

<pallas_src>
from functools import partial

import jax
import jax.numpy as jnp
from jax.experimental import pallas as pl
from jax.experimental.pallas import tpu as pltpu


# -----------------------------------------------------------------------------
# Pallas kernel: fused  W_bd @ x + bias  -> clamp(-1, 1)
# -----------------------------------------------------------------------------
def _denoiser_kernel(x_ref, w_ref, bias_ref, o_ref):
    # x_ref:    (M, tile_s)  lane-dense spatial block (io dtype, maybe bf16)
    # w_ref:    (M, M)       block-diagonal fused weight (f32, resident)
    # bias_ref: (M, 1)       fused c_out*(bias + temb)  (f32, resident)
    x = x_ref[...].astype(jnp.float32)
    h = jnp.dot(w_ref[...], x, preferred_element_type=jnp.float32)  # MXU
    out = h + bias_ref[...]                                          # VPU
    o_ref[...] = jnp.clip(out, -1.0, 1.0).astype(o_ref.dtype)        # lane-dense store


# -----------------------------------------------------------------------------
# Tiling / budget helpers
# -----------------------------------------------------------------------------
def _round_up(x, m):
    return ((x + m - 1) // m) * m


def _vmem_budget_bytes():
    """Per-generation VMEM budget for the pallas_call (used as vmem_limit_bytes)."""
    kind = ""
    try:
        kind = jax.devices()[0].device_kind.lower()
    except Exception:
        pass
    # v2-v6 chips have 128 MiB physical VMEM per core -> generous budget.
    if any(v in kind for v in ("v2", "v3", "v4", "v5", "v6", "trillium")):
        return 96 * 1024 * 1024
    # v7x has 64 MiB per TensorCore (and unknown chips): stay conservative.
    return 48 * 1024 * 1024


def _select_tile_s(m_pad, s_pad, itemsize, vmem_budget):
    """Pick the spatial tile width (multiple of 128) from the VMEM budget."""
    # Streamed bytes per lane column per step: (x + out), each double-buffered.
    stream_bytes_per_lane = 2 * 2 * m_pad * itemsize
    by_budget = (vmem_budget // 2) // stream_bytes_per_lane          # <= half the limit
    by_cap = (8 * 1024 * 1024) // (m_pad * itemsize)                 # <= ~8 MiB of x / step
    tile_s_max = max(128, (min(by_budget, by_cap) // 128) * 128)
    tile_s = min(s_pad, tile_s_max)
    # Prefer >= 2 grid steps (v7x megacore sharding + read/write overlap) when
    # each resulting tile still carries >= ~1 MiB of x.
    min_split = max(128, ((1024 * 1024) // (m_pad * itemsize) // 128) * 128)
    if tile_s == s_pad and s_pad >= 2 * min_split:
        tile_s = _round_up(pl.cdiv(s_pad, 2), 128)
    return int(tile_s)


# -----------------------------------------------------------------------------
# Pallas wrapper
# -----------------------------------------------------------------------------
def denoiser_pallas(x_ms, w_bd, bias, *, io_dtype=jnp.bfloat16):
    """x_ms: (M, S) with M = B*C (lane axis = spatial). Returns (M, S) in io_dtype."""
    M, S = x_ms.shape
    # TODO(synk): for M = B*C >~ 256 switch to batched (B,C,C) dot_general +
    # per-row c_skip instead of the O(M^2) block-diagonal weight.
    M_pad = _round_up(M, 8)       # sublane alignment for W_bd / bias / x rows
    S_pad = _round_up(S, 128)     # lane-dense, unmasked vector stores

    itemsize = jnp.dtype(io_dtype).itemsize
    budget = _vmem_budget_bytes()
    tile_s = _select_tile_s(M_pad, S_pad, itemsize, budget)
    grid = (int(pl.cdiv(S_pad, tile_s)),)

    x = x_ms.astype(io_dtype)
    w_bd = w_bd.astype(jnp.float32)
    bias = bias.astype(jnp.float32)
    padded = (M_pad != M) or (S_pad != S)
    if padded:
        x = jnp.pad(x, ((0, M_pad - M), (0, S_pad - S)))
        w_bd = jnp.pad(w_bd, ((0, M_pad - M), (0, M_pad - M)))
        bias = jnp.pad(bias, ((0, M_pad - M), (0, 0)))

    # Alias x -> output only when x is a fresh intermediate (cast/pad happened);
    # aliasing the non-donated jit argument would force XLA to copy it first.
    fresh_input = padded or (jnp.dtype(x_ms.dtype) != jnp.dtype(io_dtype))
    io_aliases = {0: 0} if fresh_input else {}

    out = pl.pallas_call(
        _denoiser_kernel,
        out_shape=jax.ShapeDtypeStruct((M_pad, S_pad), io_dtype),
        grid=grid,
        in_specs=[
            pl.BlockSpec((M_pad, tile_s), lambda i: (0, i)),   # x, spatial-tiled stream
            pl.BlockSpec((M_pad, M_pad), lambda i: (0, 0)),    # fused weight (resident)
            pl.BlockSpec((M_pad, 1), lambda i: (0, 0)),        # fused bias (resident)
        ],
        out_specs=pl.BlockSpec((M_pad, tile_s), lambda i: (0, i)),
        input_output_aliases=io_aliases,
        compiler_params=pltpu.CompilerParams(
            dimension_semantics=("parallel",),                 # megacore on v7x
            vmem_limit_bytes=budget),
    )(x, w_bd, bias)

    if padded:
        out = out[:M, :S]
    return out


# -----------------------------------------------------------------------------
# Glue: discretization table, scaling, timestep lookup, operand folding
# -----------------------------------------------------------------------------
def edm_sigmas(num_timesteps=1000, sigma_min=0.002, sigma_max=80.0, rho=7.0):
    ramp = jnp.linspace(0.0, 1.0, num_timesteps, dtype=jnp.float32)
    min_inv = sigma_min ** (1.0 / rho)
    max_inv = sigma_max ** (1.0 / rho)
    return (max_inv + ramp * (min_inv - max_inv)) ** rho  # (T,)


def edm_scaling(sigma, sigma_data=0.5):
    s2 = sigma * sigma
    d2 = sigma_data * sigma_data
    c_skip = d2 / (s2 + d2)
    c_out = sigma * sigma_data / jnp.sqrt(s2 + d2)
    c_in = 1.0 / jnp.sqrt(s2 + d2)
    return c_skip, c_out, c_in


@partial(jax.jit, static_argnames=("io_dtype",))
def cdd_denoiser_forward(x_nchw, sigma, sigmas_table, temb_table, w, b,
                         *, io_dtype=jnp.bfloat16):
    """Mirrors CDDDenoiser.forward with the synthetic network.

    x_nchw: (B, C, H, W) float32   sigma: (B,) float32
    w: (C, C) pointwise-conv weight (out[d] = sum_c w[c, d] * x[c])
    b: (C,) bias.  Output is returned in io_dtype (bf16 by default to halve
    HBM traffic of this bandwidth-bound kernel).
    """
    B, C, H, W = x_nchw.shape

    # sigma_to_idx: nearest entry in the sigma table (scalar idx, same for the
    # whole batch — matches sigma[0][0][0] usage in the PyTorch module).
    idx = jnp.argmin(jnp.abs(sigmas_table - sigma[0]))
    temb = temb_table[idx]                                          # (C,)

    # append_dims(sigma) -> per-batch broadcastable scalars
    sig = sigma.reshape(B, 1, 1).astype(jnp.float32)
    c_skip, c_out, c_in = edm_scaling(sig)                          # (B,1,1) each

    # Fold scaling + skip connection into a per-batch effective weight, then
    # into a block-diagonal (B*C, B*C) weight so the kernel runs ONE 2-D matmul.
    # W_eff[b, d, c] = c_out_b*c_in_b*w[c, d] + c_skip_b*(d==c)
    w_eff = (c_out * c_in) * w.T[None, :, :] \
        + c_skip * jnp.eye(C, dtype=jnp.float32)[None, :, :]        # (B, C, C)
    w_bd = (jnp.eye(B, dtype=jnp.float32)[:, None, :, None]
            * w_eff[:, :, None, :]).reshape(B * C, B * C)           # block-diag

    # Fused bias: c_out_b * (bias + temb)
    bias_eff = (c_out * (b + temb).reshape(1, C, 1)).reshape(B * C, 1)

    # NCHW -> (B*C, H*W) is a free reshape (no transposes, no extra HBM traffic).
    x_ms = x_nchw.reshape(B * C, H * W)
    out_ms = denoiser_pallas(x_ms, w_bd, bias_eff, io_dtype=io_dtype)
    return out_ms.reshape(B, C, H, W)


def reference_forward(x_nchw, sigma, sigmas_table, temb_table, w, b):
    """Pure-jnp reference (mirrors the PyTorch forward) for correctness."""
    B, C, H, W = x_nchw.shape
    idx = jnp.argmin(jnp.abs(sigmas_table - sigma[0]))
    temb = temb_table[idx]
    sig = sigma.reshape(B, 1, 1, 1)
    c_skip, c_out, c_in = edm_scaling(sig)
    x_in = c_in * x_nchw
    h = jnp.einsum('bchw,cd->bdhw', x_in, w) \
        + b.reshape(1, C, 1, 1) + temb.reshape(1, C, 1, 1)
    return jnp.clip(c_out * h + c_skip * x_nchw, -1.0, 1.0)


# -----------------------------------------------------------------------------
if __name__ == "__main__":
    key = jax.random.PRNGKey(0)
    k_x, k_s, k_w, k_b, k_t, k_x2, k_s2 = jax.random.split(key, 7)

    NUM_T = 1000
    sigmas_table = edm_sigmas(NUM_T)                                  # (T,)

    # ----- primary small config -----
    B, C, H, W = 2, 8, 16, 16
    x = jax.random.normal(k_x, (B, C, H, W), dtype=jnp.float32)
    sigma = jax.random.uniform(k_s, (B,), minval=0.1, maxval=5.0,
                               dtype=jnp.float32)
    temb_table = 0.1 * jax.random.normal(k_t, (NUM_T, C), jnp.float32)
    w = 0.2 * jax.random.normal(k_w, (C, C), jnp.float32)             # 1x1 conv
    b = 0.05 * jax.random.normal(k_b, (C,), jnp.float32)

    # bf16-streamed path (halves HBM traffic; accumulation / clamp stay f32).
    out_bf16 = jax.block_until_ready(
        cdd_denoiser_forward(x, sigma, sigmas_table, temb_table, w, b,
                             io_dtype=jnp.bfloat16))
    ref_bf16 = reference_forward(x.astype(jnp.bfloat16).astype(jnp.float32),
                                 sigma, sigmas_table, temb_table, w, b)
    assert out_bf16.shape == (B, C, H, W)
    assert jnp.allclose(out_bf16.astype(jnp.float32), ref_bf16, atol=2e-2), \
        "bf16 path mismatch vs reference"

    # f32 path (exact original numerics).
    out_f32 = jax.block_until_ready(
        cdd_denoiser_forward(x, sigma, sigmas_table, temb_table, w, b,
                             io_dtype=jnp.float32))
    ref_f32 = reference_forward(x, sigma, sigmas_table, temb_table, w, b)
    assert jnp.allclose(out_f32, ref_f32, atol=1e-5, rtol=1e-5), \
        "f32 path mismatch vs reference"

    # Odd shape: exercises M (sublane) and S (lane) padding + cdiv grid.
    B2, C2, H2, W2 = 2, 7, 30, 30
    x2 = jax.random.normal(k_x2, (B2, C2, H2, W2), dtype=jnp.float32)
    sigma2 = jax.random.uniform(k_s2, (B2,), minval=0.1, maxval=5.0,
                                dtype=jnp.float32)
    temb2 = 0.1 * jax.random.normal(k_t, (NUM_T, C2), jnp.float32)
    w2 = 0.2 * jax.random.normal(k_w, (C2, C2), jnp.float32)
    b2 = 0.05 * jax.random.normal(k_b, (C2,), jnp.float32)
    out2 = jax.block_until_ready(
        cdd_denoiser_forward(x2, sigma2, sigmas_table, temb2, w2, b2,
                             io_dtype=jnp.float32))
    ref2 = reference_forward(x2, sigma2, sigmas_table, temb2, w2, b2)
    assert jnp.allclose(out2, ref2, atol=1e-5, rtol=1e-5), \
        "padded-shape path mismatch vs reference"

    print("KERNEL_OK")
</pallas_src>

<mosaic_0001>
module attributes {stable_mosaic.version = 11 : i64} {
  func.func @_denoiser_kernel(%arg0: i32, %arg1: memref<16x256xbf16, #tpu.memory_space<vmem>>, %arg2: memref<16x16xf32, #tpu.memory_space<vmem>>, %arg3: memref<16x1xf32, #tpu.memory_space<vmem>>, %arg4: memref<16x256xbf16, #tpu.memory_space<vmem>>) attributes {dimension_semantics = [#tpu.dimension_semantics<parallel>], iteration_bounds = array<i64: 1>, scalar_prefetch = 0 : i64, scratch_operands = 0 : i64, tpu.core_type = #tpu.core_type<tc>, window_params = [{transform_indices = @transform_0, window_bounds = array<i64: 16, 256>}, {pipeline_mode = #tpu.pipeline_mode<synchronous>, transform_indices = @transform_1, window_bounds = array<i64: 16, 16>}, {pipeline_mode = #tpu.pipeline_mode<synchronous>, transform_indices = @transform_2, window_bounds = array<i64: 16, 1>}, {transform_indices = @transform_3, window_bounds = array<i64: 16, 256>}]} {
    %c0 = arith.constant 0 : index
    %c0_0 = arith.constant 0 : index
    %0 = vector.load %arg1[%c0, %c0_0] : memref<16x256xbf16, #tpu.memory_space<vmem>>, vector<16x256xbf16>
    %1 = arith.extf %0 : vector<16x256xbf16> to vector<16x256xf32>
    %c0_1 = arith.constant 0 : index
    %c0_2 = arith.constant 0 : index
    %2 = vector.load %arg2[%c0_1, %c0_2] : memref<16x16xf32, #tpu.memory_space<vmem>>, vector<16x16xf32>
    %cst = arith.constant dense<0.000000e+00> : vector<16x256xf32>
    %3 = tpu.matmul %2, %1, %cst {dimension_numbers = #tpu.dot_dimension_numbers<[1], [0], [0], [1], [0, 0, 1, 1], [], []>} : vector<16x16xf32>, vector<16x256xf32>, vector<16x256xf32> -> vector<16x256xf32>
    %c0_3 = arith.constant 0 : index
    %c0_4 = arith.constant 0 : index
    %4 = vector.load %arg3[%c0_3, %c0_4] : memref<16x1xf32, #tpu.memory_space<vmem>>, vector<16x1xf32>
    %5 = vector.broadcast %4 : vector<16x1xf32> to vector<16x256xf32>
    %6 = arith.addf %3, %5 : vector<16x256xf32>
    %cst_5 = arith.constant -1.000000e+00 : f32
    %cst_6 = arith.constant 1.000000e+00 : f32
    %7 = vector.broadcast %cst_5 : f32 to vector<16x256xf32>
    %8 = arith.maximumf %7, %6 : vector<16x256xf32>
    %9 = vector.broadcast %cst_6 : f32 to vector<16x256xf32>
    %10 = arith.minimumf %9, %8 : vector<16x256xf32>
    %11 = arith.truncf %10 : vector<16x256xf32> to vector<16x256xbf16>
    %c0_7 = arith.constant 0 : index
    %c0_8 = arith.constant 0 : index
    %12 = vector.load %arg4[%c0_7, %c0_8] : memref<16x256xbf16, #tpu.memory_space<vmem>>, vector<16x256xbf16>
    tpu.vector_store %arg4[%c0_7, %c0_8], %11 {strides = array<i32>} : memref<16x256xbf16, #tpu.memory_space<vmem>>, vector<16x256xbf16>,
    return
  }
  func.func @transform_0(%arg0: i32) -> (i32, i32) {
    %c0_i32 = arith.constant 0 : i32
    %c0_i32_0 = arith.constant 0 : i32
    return %c0_i32, %arg0 : i32, i32
  }
  func.func @transform_1(%arg0: i32) -> (i32, i32) {
    %c0_i32 = arith.constant 0 : i32
    %c0_i32_0 = arith.constant 0 : i32
    %c0_i32_1 = arith.constant 0 : i32
    return %c0_i32, %c0_i32_0 : i32, i32
  }
  func.func @transform_2(%arg0: i32) -> (i32, i32) {
    %c0_i32 = arith.constant 0 : i32
    %c0_i32_0 = arith.constant 0 : i32
    %c0_i32_1 = arith.constant 0 : i32
    return %c0_i32, %c0_i32_0 : i32, i32
  }
  func.func @transform_3(%arg0: i32) -> (i32, i32) {
    %c0_i32 = arith.constant 0 : i32
    %c0_i32_0 = arith.constant 0 : i32
    return %c0_i32, %arg0 : i32, i32
  }
}

</mosaic_0001>

<llo_original>
// kernel: mul.20
$region0: #{mul.20}
  #allocation0 [shape = 's32[1]{0}', space=sflag, size = 0x4, scoped, tag = 'scoped memory for mul.20']
  %s0 = inlined_call_operand.vmem [shape: f32[16,1], index: 0, kind: input, shape index: {}]
  %s1 = inlined_call_operand.vmem [shape: f32[16,1], index: 1, kind: input, shape index: {}]
  %s2 = inlined_call_operand.vmem [shape: f32[16,1], index: 2, kind: output, shape index: {}]
  %v3 = vld [vmem:[%s0] sm:$0x1]
  %v4 = vld [vmem:[%s1] sm:$0x1]
  %5 = xla_tuple %v3, %v4
  %6 = xla_tuple %5
  %v7 = vmul.f32 %v3, %v4
  %8 = xla_tuple %v7
  %9 = vst [vmem:[%s2] sm:$0x1] %v7

// kernel: cdd_denoiser_forward.1
$region0: #{cdd_denoiser_forward.1}
  #allocation0 [shape = 'u32[]', space=smem, size = 0x4, offset = 0x4, fixed_abs, tag = 'smem constant byte address 0x4 - core index']
  #allocation1 [shape = 'u32[144,128]{1,0:T(1,128)}', space=vmem, size = 0x12000, scoped, tag = 'internal scratch']
  %s0 = inlined_call_operand.vmem [shape: bf16[16,256], index: 0, kind: input, shape index: {}, may-alias: {0,3}]
  %s1 = inlined_call_operand.vmem [shape: f32[16,16], index: 1, kind: input, shape index: {}]
  %s2 = inlined_call_operand.vmem [shape: f32[16,1], index: 2, kind: input, shape index: {}]
  %s3 = inlined_call_operand.vmem [shape: bf16[16,256], index: 3, kind: output, shape index: {}, may-alias: {0,3}]
  %s4 = sld [smem:[#allocation0]]
  $region22: #{cdd_denoiser_forward.1} parent=0
    _
  %s6 = ssub.s32 1, %s4
  %s7 = scalar_select 0, %s6, %s4
  // Predicated region
  $region2: #{cdd_denoiser_forward.1} parent=0 // pred_check
    _
  $region3: #{cdd_denoiser_forward.1} parent=0 // pred_check_branch
    %9 = sbr.rel (0) target = $region5
  $region4: #{cdd_denoiser_forward.1} parent=0 // pred_region
    _
  $region5: #{cdd_denoiser_forward.1} parent=0 // pred_fallthru
    _
  // Predicated region
  $region6: #{cdd_denoiser_forward.1} parent=0 // pred_check
    _
  $region7: #{cdd_denoiser_forward.1} parent=0 // pred_check_branch
    %11 = sbr.rel (0) target = $region9
  $region8: #{cdd_denoiser_forward.1} parent=0 // pred_region
    _
  $region9: #{cdd_denoiser_forward.1} parent=0 // pred_fallthru
    _
  // Predicated region
  $region10: #{cdd_denoiser_forward.1} parent=0 // pred_check
    _
  $region11: #{cdd_denoiser_forward.1} parent=0 // pred_check_branch
    %13 = sbr.rel (0) target = $region13
  $region12: #{cdd_denoiser_forward.1} parent=0 // pred_region
    _
  $region13: #{cdd_denoiser_forward.1} parent=0 // pred_fallthru
    _
  %v14 = vld [vmem:[%s0] sm:$0xff]
  %v15 = vld [vmem:[%s0 + $0x8] sm:$0xff]
  %v16 = vunpack.c.l.bf16 %v14
  %v17 = vunpack.c.h.bf16 %v14
  %v18 = vunpack.c.l.bf16 %v15
  %v19 = vunpack.c.h.bf16 %v15
  %v20 = vld [vmem:[%s1] sm:$0xff]
  %v21 = vld [vmem:[%s1 + $0x8] sm:$0xff]
  %v22 = vld [vmem:[%s2] sm:$0xff]
  %v23 = vld [vmem:[%s2 + $0x8] sm:$0xff]
  %25 = vset.pattern.permute.xlu0 0
  %26 = vperm.xlu0 %25, %v22
  %v27 = vpop.permute.xlu0 %26
  %30 = vset.pattern.permute.xlu0 0
  %31 = vperm.xlu0 %30, %v23
  %v32 = vpop.permute.xlu0 %31
  %vm34 = vcmask 130048
  %v36 = vsel %vm34, %v20, 0
  %v39 = vsel %vm34, %v21, 0
  %41 = vmatprep.subr.mxu0 %v17
  %42 = vmatpush1.msra.mxu0 %v16
  %43 = vmatprep.subr.mxu0 %v19
  %44 = vmatpush1.msra.mxu0 %v18
  %45 = vmatprep.subr.mxu0 0.0
  %46 = vmatpush1.msra.mxu0 0.0
  %47 = vmatprep.subr.mxu0 0.0
  %48 = vmatpush1.msra.mxu0 0.0
  %49 = vmatprep.subr.mxu0 0.0
  %50 = vmatpush1.msra.mxu0 0.0
  %51 = vmatprep.subr.mxu0 0.0
  %52 = vmatpush1.msra.mxu0 0.0
  %53 = vmatprep.subr.mxu0 0.0
  %54 = vmatpush1.msra.mxu0 0.0
  %55 = vmatprep.subr.mxu0 0.0
  %56 = vmatpush1.msra.mxu0 0.0
  %57 = vmatprep.subr.mxu0 0.0
  %58 = vmatpush1.msra.mxu0 0.0
  %59 = vmatprep.subr.mxu0 0.0
  %60 = vmatpush1.msra.mxu0 0.0
  %61 = vmatprep.subr.mxu0 0.0
  %62 = vmatpush1.msra.mxu0 0.0
  %63 = vmatprep.subr.mxu0 0.0
  %64 = vmatpush1.msra.mxu0 0.0
  %65 = vmatprep.subr.mxu0 0.0
  %66 = vmatpush1.msra.mxu0 0.0
  %67 = vmatprep.subr.mxu0 0.0
  %68 = vmatpush1.msra.mxu0 0.0
  %69 = vmatprep.subr.mxu0 0.0
  %70 = vmatpush1.msra.mxu0 0.0
  %71 = vmatprep.subr.mxu0 0.0
  %72 = vmatpush1.msra.mxu0 0.0
  %73 = vmatprep.subr.mxu0 0.0
  %74 = vmatpush1.msra.mxu0 0.0
  %75 = vmatprep.subr.mxu0 0.0
  %76 = vmatpush1.msra.mxu0 0.0
  %77 = vmatprep.subr.mxu0 0.0
  %78 = vmatpush1.msra.mxu0 0.0
  %79 = vmatprep.subr.mxu0 0.0
  %80 = vmatpush1.msra.mxu0 0.0
  %81 = vmatprep.subr.mxu0 0.0
  %82 = vmatpush1.msra.mxu0 0.0
  %83 = vmatprep.subr.mxu0 0.0
  %84 = vmatpush1.msra.mxu0 0.0
  %85 = vmatprep.subr.mxu0 0.0
  %86 = vmatpush1.msra.mxu0 0.0
  %87 = vmatprep.subr.mxu0 0.0
  %88 = vmatpush1.msra.mxu0 0.0
  %89 = vmatprep.subr.mxu0 0.0
  %90 = vmatpush1.msra.mxu0 0.0
  %91 = vmatprep.subr.mxu0 0.0
  %92 = vmatpush1.msra.mxu0 0.0
  %93 = vmatprep.subr.mxu0 0.0
  %94 = vmatpush1.msra.mxu0 0.0
  %95 = vmatprep.subr.mxu0 0.0
  %96 = vmatpush1.msra.mxu0 0.0
  %97 = vmatprep.subr.mxu0 0.0
  %98 = vmatpush1.msra.mxu0 0.0
  %99 = vmatprep.subr.mxu0 0.0
  %100 = vmatpush1.msra.mxu0 0.0
  %101 = vmatprep.subr.mxu0 0.0
  %102 = vmatpush1.msra.mxu0 0.0
  %103 = vmatprep.subr.mxu0 0.0
  %104 = vmatpush1.msra.mxu0 0.0
  %105 = vmatprep.mubr.f32.mxu0 0.0
  %106 = vmatmul.mubr.f32.gmra.mrb[0].mxu0 %v36
  %v107 = vpop.f32.mrb[0].mxu0
  %v108 = vadd.f32 %v27, %v107
  %v109 = vpop.f32.mrb[0].mxu0
  %v110 = vadd.f32 %v27, %v109
  %111 = vmatprep.mubr.f32.mxu0 0.0
  %112 = vmatmul.mubr.f32.gmra.mrb[0].mxu0 %v39
  %v113 = vpop.f32.mrb[0].mxu0
  %v114 = vadd.f32 %v32, %v113
  %v115 = vpop.f32.mrb[0].mxu0
  %v116 = vadd.f32 %v32, %v115
  %117 = vdwg.mxu0
  %v118 = vmax.f32 %v108, -1.0
  %v119 = vmax.f32 %v110, -1.0
  %v120 = vmax.f32 %v114, -1.0
  %v121 = vmax.f32 %v116, -1.0
  %v122 = vmin.f32 %v118, 1.0
  %v123 = vmin.f32 %v119, 1.0
  %v124 = vmin.f32 %v120, 1.0
  %v125 = vmin.f32 %v121, 1.0
  %v126 = vpack.c.bf16 %v124, %v122
  %v127 = vpack.c.bf16 %v125, %v123
  %v130 = vunpack.c.l.b16 %v126
  %v131 = vunpack.c.l.b16 %v127
  %v132 = vunpack.c.h.b16 %v126
  %v133 = vunpack.c.h.b16 %v127
  %v134 = vpack.c.b16 %v131, %v130
  %v135 = vpack.c.b16 %v133, %v132
  %138 = vst [vmem:[%s3] sm:$0xff] %v134
  %139 = vst [vmem:[%s3 + $0x8] sm:$0xff] %v135
  // Predicated region
  $region14: #{cdd_denoiser_forward.1} parent=0 // pred_check
    _
  $region15: #{cdd_denoiser_forward.1} parent=0 // pred_check_branch
    %141 = sbr.rel (0) target = $region17
  $region16: #{cdd_denoiser_forward.1} parent=0 // pred_region
    _
  $region17: #{cdd_denoiser_forward.1} parent=0 // pred_fallthru
    _
  // Predicated region
  $region18: #{cdd_denoiser_forward.1} parent=0 // pred_check
    _
  $region19: #{cdd_denoiser_forward.1} parent=0 // pred_check_branch
    %143 = sbr.rel (0) target = $region21
  $region20: #{cdd_denoiser_forward.1} parent=0 // pred_region
    _
  $region21: #{cdd_denoiser_forward.1} parent=0 // pred_fallthru
    _

</llo_original>
